<compile_context>
chip_gen: v7x
topology: tpu7x:2x2x1
jax: 0.10.0
libtpu: 0.0.40
codegen_flags: <defaults>
</compile_context>

<pallas_src>
import jax
import jax.numpy as jnp
from jax.experimental import pallas as pl
from jax.experimental.pallas import tpu as pltpu

_EPS = 1e-5
_VEC_ROWS = 16    # padded sublane count for the packed per-feature vector slab
_VEC_LANES = 128  # lane-dense width (all feature dims must be <= 128)


def _make_kernel(dims):
    """dims = (in_dim, h1, h2, h3, h4, h5, out_dim); widths baked in statically."""
    widths = dims[1:]  # output width of each of the 6 linear layers

    def kernel(x_ref, w1, w2, w3, w4, w5, w6, vec_ref, out_ref):
        w_refs = (w1, w2, w3, w4, w5, w6)

        def linear(h, li):
            # MXU matmul, f32 accumulate. No bias for layers 0..4 (cancelled by BN).
            return jnp.dot(h, w_refs[li][...], preferred_element_type=jnp.float32)

        def batchnorm(h, li):
            # Training-mode BN folded to one scale/shift.
            n = widths[li]
            g = vec_ref[2 * li:2 * li + 1, :n]        # (1, n)
            be = vec_ref[2 * li + 1:2 * li + 2, :n]   # (1, n)
            mu = jnp.mean(h, axis=0, keepdims=True)
            var = jnp.mean(h * h, axis=0, keepdims=True) - mu * mu  # one-pass, biased
            s = g * jax.lax.rsqrt(var + _EPS)         # rsqrt on EUP (free slot)
            t = be - mu * s
            return h * s + t

        h = x_ref[...]
        h = jnp.maximum(batchnorm(linear(h, 0), 0), 0.0)   # layer1: Lin->BN->ReLU
        h = jnp.maximum(batchnorm(linear(h, 1), 1), 0.0)   # layer2: Lin->BN->ReLU
        h = jnp.maximum(batchnorm(linear(h, 2), 2), 0.0)   # layer3: Lin->BN->ReLU
        h = batchnorm(linear(h, 3), 3)                     # layer4: Lin->BN
        h = batchnorm(linear(h, 4), 4)                     # layer5: Lin->BN
        logits = linear(h, 5) + vec_ref[10:11, :widths[5]] # layer6: Lin (+ b6)

        # softmax over dim 1; reciprocal (EUP) instead of a per-lane divide.
        m = jnp.max(logits, axis=1, keepdims=True)
        e = jnp.exp(logits - m)
        inv = pl.reciprocal(jnp.sum(e, axis=1, keepdims=True))
        out_ref[...] = e * inv

    return kernel


def _pack_vectors(gammas, betas, b6):
    """Pack gamma/beta (5 BN layers) + final bias into one (16,128) f32 slab.
    Row layout: [g1, be1, g2, be2, g3, be3, g4, be4, g5, be5, b6, <pad>...]."""
    vec = jnp.zeros((_VEC_ROWS, _VEC_LANES), jnp.float32)
    for li, (g, b) in enumerate(zip(gammas, betas)):
        vec = vec.at[2 * li, : g.shape[0]].set(g)
        vec = vec.at[2 * li + 1, : b.shape[0]].set(b)
    vec = vec.at[10, : b6.shape[0]].set(b6)
    return vec


def init_params(key, dims):
    """Mirror PyTorch module params. Weights stored [in, out] so the hot path is
    h @ W. Linear init: U(-1/sqrt(fan_in), +1/sqrt(fan_in)). gamma/beta are
    randomized (PyTorch default is ones/zeros) purely to exercise the BN affine
    path in the correctness check — forward semantics are value-independent."""
    ws, bs, gs, bes = [], [], [], []
    keys = jax.random.split(key, 6)
    for li in range(6):
        fan_in, fan_out = dims[li], dims[li + 1]
        kw, kb, kg, kbe = jax.random.split(keys[li], 4)
        bound = 1.0 / (fan_in ** 0.5)
        ws.append(jax.random.uniform(kw, (fan_in, fan_out), jnp.float32, -bound, bound))
        bs.append(jax.random.uniform(kb, (fan_out,), jnp.float32, -bound, bound))
        if li < 5:
            gs.append(jax.random.uniform(kg, (fan_out,), jnp.float32, 0.5, 1.5))
            bes.append(0.1 * jax.random.normal(kbe, (fan_out,), jnp.float32))
    return {"w": ws, "b": bs, "gamma": gs, "beta": bes}


def net_forward(x, params, dims):
    assert all(d <= _VEC_LANES for d in dims[1:]), "feature dims must fit in 128 lanes"
    batch = x.shape[0]
    x2d = x.reshape(batch, -1).astype(jnp.float32)   # x.reshape(x.size(0), -1)
    out_dim = dims[-1]

    vec = _pack_vectors(params["gamma"], params["beta"], params["b"][5])
    vmem = pl.BlockSpec(memory_space=pltpu.MemorySpace.VMEM)
    n_in = 1 + 6 + 1  # x, 6 weight matrices, packed per-feature vector slab

    return pl.pallas_call(
        _make_kernel(dims),
        out_shape=jax.ShapeDtypeStruct((batch, out_dim), jnp.float32),
        in_specs=[vmem] * n_in,
        out_specs=vmem,
    )(x2d, *params["w"], vec)


def reference_forward(x, params, dims):
    """Pure-JAX mirror of the PyTorch forward (includes the BN-shadowed biases
    and two-pass variance) to validate the kernel's algebraic simplifications."""
    h = x.reshape(x.shape[0], -1).astype(jnp.float32)
    for li in range(6):
        h = h @ params["w"][li] + params["b"][li]
        if li < 5:
            mu = jnp.mean(h, axis=0, keepdims=True)
            var = jnp.mean((h - mu) ** 2, axis=0, keepdims=True)  # biased, train-mode
            h = (h - mu) / jnp.sqrt(var + _EPS) * params["gamma"][li] + params["beta"][li]
            if li < 3:
                h = jnp.maximum(h, 0.0)
    return jax.nn.softmax(h, axis=1)


if __name__ == "__main__":
    # batch=8 (one full sublane set), input flattens to in_dim=32.
    dims = (32, 64, 64, 32, 32, 16, 8)  # in, h1..h5, out

    root = jax.random.PRNGKey(0)
    k_x, k_p = jax.random.split(root)
    x = jax.random.normal(k_x, (8, 2, 4, 4), jnp.float32)  # -> (8, 32)
    params = init_params(k_p, dims)

    out = net_forward(x, params, dims)
    jax.block_until_ready(out)

    ref = reference_forward(x, params, dims)
    assert out.shape == (8, dims[-1])
    # softmax rows sum to 1
    assert bool(jnp.all(jnp.abs(jnp.sum(out, axis=1) - 1.0) < 1e-4))
    # matches the full PyTorch-style forward (with b1..b5, two-pass variance)
    assert bool(jnp.allclose(out, ref, atol=1e-3, rtol=1e-3))
    print("KERNEL_OK")
</pallas_src>

<mosaic_0001>
module attributes {stable_mosaic.version = 11 : i64} {
  func.func @kernel(%arg0: memref<8x32xf32, #tpu.memory_space<vmem>>, %arg1: memref<32x64xf32, #tpu.memory_space<vmem>>, %arg2: memref<64x64xf32, #tpu.memory_space<vmem>>, %arg3: memref<64x32xf32, #tpu.memory_space<vmem>>, %arg4: memref<32x32xf32, #tpu.memory_space<vmem>>, %arg5: memref<32x16xf32, #tpu.memory_space<vmem>>, %arg6: memref<16x8xf32, #tpu.memory_space<vmem>>, %arg7: memref<16x128xf32, #tpu.memory_space<vmem>>, %arg8: memref<8x8xf32, #tpu.memory_space<vmem>>) attributes {dimension_semantics = [], scalar_prefetch = 0 : i64, scratch_operands = 0 : i64, tpu.core_type = #tpu.core_type<tc>} {
    %c0 = arith.constant 0 : index
    %c0_0 = arith.constant 0 : index
    %0 = vector.load %arg0[%c0, %c0_0] : memref<8x32xf32, #tpu.memory_space<vmem>>, vector<8x32xf32>
    %c0_1 = arith.constant 0 : index
    %c0_2 = arith.constant 0 : index
    %1 = vector.load %arg1[%c0_1, %c0_2] : memref<32x64xf32, #tpu.memory_space<vmem>>, vector<32x64xf32>
    %cst = arith.constant dense<0.000000e+00> : vector<8x64xf32>
    %2 = tpu.matmul %0, %1, %cst {dimension_numbers = #tpu.dot_dimension_numbers<[1], [0], [0], [1], [0, 0, 1, 1], [], []>} : vector<8x32xf32>, vector<32x64xf32>, vector<8x64xf32> -> vector<8x64xf32>
    %c0_3 = arith.constant 0 : index
    %c0_4 = arith.constant 0 : index
    %3 = vector.load %arg7[%c0_3, %c0_4] : memref<16x128xf32, #tpu.memory_space<vmem>>, vector<1x64xf32>
    %c1 = arith.constant 1 : index
    %c0_5 = arith.constant 0 : index
    %4 = vector.load %arg7[%c1, %c0_5] : memref<16x128xf32, #tpu.memory_space<vmem>>, vector<1x64xf32>
    %cst_6 = arith.constant dense<0.000000e+00> : vector<64xf32>
    %5 = vector.multi_reduction <add>, %2, %cst_6 [0] : vector<8x64xf32> to vector<64xf32>
    %6 = vector.shape_cast %5 : vector<64xf32> to vector<1x64xf32>
    %cst_7 = arith.constant 8.000000e+00 : f32
    %7 = vector.broadcast %cst_7 : f32 to vector<1x64xf32>
    %8 = arith.divf %6, %7 : vector<1x64xf32>
    %9 = arith.mulf %2, %2 : vector<8x64xf32>
    %cst_8 = arith.constant dense<0.000000e+00> : vector<64xf32>
    %10 = vector.multi_reduction <add>, %9, %cst_8 [0] : vector<8x64xf32> to vector<64xf32>
    %11 = vector.shape_cast %10 : vector<64xf32> to vector<1x64xf32>
    %cst_9 = arith.constant 8.000000e+00 : f32
    %12 = vector.broadcast %cst_9 : f32 to vector<1x64xf32>
    %13 = arith.divf %11, %12 : vector<1x64xf32>
    %14 = arith.mulf %8, %8 : vector<1x64xf32>
    %15 = arith.subf %13, %14 : vector<1x64xf32>
    %cst_10 = arith.constant 9.99999974E-6 : f32
    %16 = vector.broadcast %cst_10 : f32 to vector<1x64xf32>
    %17 = arith.addf %15, %16 : vector<1x64xf32>
    %18 = math.rsqrt %17 : vector<1x64xf32>
    %19 = arith.mulf %3, %18 : vector<1x64xf32>
    %20 = arith.mulf %8, %19 : vector<1x64xf32>
    %21 = arith.subf %4, %20 : vector<1x64xf32>
    %22 = vector.broadcast %19 : vector<1x64xf32> to vector<8x64xf32>
    %23 = arith.mulf %2, %22 : vector<8x64xf32>
    %24 = vector.broadcast %21 : vector<1x64xf32> to vector<8x64xf32>
    %25 = arith.addf %23, %24 : vector<8x64xf32>
    %cst_11 = arith.constant 0.000000e+00 : f32
    %26 = vector.broadcast %cst_11 : f32 to vector<8x64xf32>
    %27 = arith.maximumf %25, %26 : vector<8x64xf32>
    %c0_12 = arith.constant 0 : index
    %c0_13 = arith.constant 0 : index
    %28 = vector.load %arg2[%c0_12, %c0_13] : memref<64x64xf32, #tpu.memory_space<vmem>>, vector<64x64xf32>
    %cst_14 = arith.constant dense<0.000000e+00> : vector<8x64xf32>
    %29 = tpu.matmul %27, %28, %cst_14 {dimension_numbers = #tpu.dot_dimension_numbers<[1], [0], [0], [1], [0, 0, 1, 1], [], []>} : vector<8x64xf32>, vector<64x64xf32>, vector<8x64xf32> -> vector<8x64xf32>
    %c2 = arith.constant 2 : index
    %c0_15 = arith.constant 0 : index
    %30 = vector.load %arg7[%c2, %c0_15] : memref<16x128xf32, #tpu.memory_space<vmem>>, vector<1x64xf32>
    %c3 = arith.constant 3 : index
    %c0_16 = arith.constant 0 : index
    %31 = vector.load %arg7[%c3, %c0_16] : memref<16x128xf32, #tpu.memory_space<vmem>>, vector<1x64xf32>
    %cst_17 = arith.constant dense<0.000000e+00> : vector<64xf32>
    %32 = vector.multi_reduction <add>, %29, %cst_17 [0] : vector<8x64xf32> to vector<64xf32>
    %33 = vector.shape_cast %32 : vector<64xf32> to vector<1x64xf32>
    %cst_18 = arith.constant 8.000000e+00 : f32
    %34 = vector.broadcast %cst_18 : f32 to vector<1x64xf32>
    %35 = arith.divf %33, %34 : vector<1x64xf32>
    %36 = arith.mulf %29, %29 : vector<8x64xf32>
    %cst_19 = arith.constant dense<0.000000e+00> : vector<64xf32>
    %37 = vector.multi_reduction <add>, %36, %cst_19 [0] : vector<8x64xf32> to vector<64xf32>
    %38 = vector.shape_cast %37 : vector<64xf32> to vector<1x64xf32>
    %cst_20 = arith.constant 8.000000e+00 : f32
    %39 = vector.broadcast %cst_20 : f32 to vector<1x64xf32>
    %40 = arith.divf %38, %39 : vector<1x64xf32>
    %41 = arith.mulf %35, %35 : vector<1x64xf32>
    %42 = arith.subf %40, %41 : vector<1x64xf32>
    %cst_21 = arith.constant 9.99999974E-6 : f32
    %43 = vector.broadcast %cst_21 : f32 to vector<1x64xf32>
    %44 = arith.addf %42, %43 : vector<1x64xf32>
    %45 = math.rsqrt %44 : vector<1x64xf32>
    %46 = arith.mulf %30, %45 : vector<1x64xf32>
    %47 = arith.mulf %35, %46 : vector<1x64xf32>
    %48 = arith.subf %31, %47 : vector<1x64xf32>
    %49 = vector.broadcast %46 : vector<1x64xf32> to vector<8x64xf32>
    %50 = arith.mulf %29, %49 : vector<8x64xf32>
    %51 = vector.broadcast %48 : vector<1x64xf32> to vector<8x64xf32>
    %52 = arith.addf %50, %51 : vector<8x64xf32>
    %cst_22 = arith.constant 0.000000e+00 : f32
    %53 = vector.broadcast %cst_22 : f32 to vector<8x64xf32>
    %54 = arith.maximumf %52, %53 : vector<8x64xf32>
    %c0_23 = arith.constant 0 : index
    %c0_24 = arith.constant 0 : index
    %55 = vector.load %arg3[%c0_23, %c0_24] : memref<64x32xf32, #tpu.memory_space<vmem>>, vector<64x32xf32>
    %cst_25 = arith.constant dense<0.000000e+00> : vector<8x32xf32>
    %56 = tpu.matmul %54, %55, %cst_25 {dimension_numbers = #tpu.dot_dimension_numbers<[1], [0], [0], [1], [0, 0, 1, 1], [], []>} : vector<8x64xf32>, vector<64x32xf32>, vector<8x32xf32> -> vector<8x32xf32>
    %c4 = arith.constant 4 : index
    %c0_26 = arith.constant 0 : index
    %57 = vector.load %arg7[%c4, %c0_26] : memref<16x128xf32, #tpu.memory_space<vmem>>, vector<1x32xf32>
    %c5 = arith.constant 5 : index
    %c0_27 = arith.constant 0 : index
    %58 = vector.load %arg7[%c5, %c0_27] : memref<16x128xf32, #tpu.memory_space<vmem>>, vector<1x32xf32>
    %cst_28 = arith.constant dense<0.000000e+00> : vector<32xf32>
    %59 = vector.multi_reduction <add>, %56, %cst_28 [0] : vector<8x32xf32> to vector<32xf32>
    %60 = vector.shape_cast %59 : vector<32xf32> to vector<1x32xf32>
    %cst_29 = arith.constant 8.000000e+00 : f32
    %61 = vector.broadcast %cst_29 : f32 to vector<1x32xf32>
    %62 = arith.divf %60, %61 : vector<1x32xf32>
    %63 = arith.mulf %56, %56 : vector<8x32xf32>
    %cst_30 = arith.constant dense<0.000000e+00> : vector<32xf32>
    %64 = vector.multi_reduction <add>, %63, %cst_30 [0] : vector<8x32xf32> to vector<32xf32>
    %65 = vector.shape_cast %64 : vector<32xf32> to vector<1x32xf32>
    %cst_31 = arith.constant 8.000000e+00 : f32
    %66 = vector.broadcast %cst_31 : f32 to vector<1x32xf32>
    %67 = arith.divf %65, %66 : vector<1x32xf32>
    %68 = arith.mulf %62, %62 : vector<1x32xf32>
    %69 = arith.subf %67, %68 : vector<1x32xf32>
    %cst_32 = arith.constant 9.99999974E-6 : f32
    %70 = vector.broadcast %cst_32 : f32 to vector<1x32xf32>
    %71 = arith.addf %69, %70 : vector<1x32xf32>
    %72 = math.rsqrt %71 : vector<1x32xf32>
    %73 = arith.mulf %57, %72 : vector<1x32xf32>
    %74 = arith.mulf %62, %73 : vector<1x32xf32>
    %75 = arith.subf %58, %74 : vector<1x32xf32>
    %76 = vector.broadcast %73 : vector<1x32xf32> to vector<8x32xf32>
    %77 = arith.mulf %56, %76 : vector<8x32xf32>
    %78 = vector.broadcast %75 : vector<1x32xf32> to vector<8x32xf32>
    %79 = arith.addf %77, %78 : vector<8x32xf32>
    %cst_33 = arith.constant 0.000000e+00 : f32
    %80 = vector.broadcast %cst_33 : f32 to vector<8x32xf32>
    %81 = arith.maximumf %79, %80 : vector<8x32xf32>
    %c0_34 = arith.constant 0 : index
    %c0_35 = arith.constant 0 : index
    %82 = vector.load %arg4[%c0_34, %c0_35] : memref<32x32xf32, #tpu.memory_space<vmem>>, vector<32x32xf32>
    %cst_36 = arith.constant dense<0.000000e+00> : vector<8x32xf32>
    %83 = tpu.matmul %81, %82, %cst_36 {dimension_numbers = #tpu.dot_dimension_numbers<[1], [0], [0], [1], [0, 0, 1, 1], [], []>} : vector<8x32xf32>, vector<32x32xf32>, vector<8x32xf32> -> vector<8x32xf32>
    %c6 = arith.constant 6 : index
    %c0_37 = arith.constant 0 : index
    %84 = vector.load %arg7[%c6, %c0_37] : memref<16x128xf32, #tpu.memory_space<vmem>>, vector<1x32xf32>
    %c7 = arith.constant 7 : index
    %c0_38 = arith.constant 0 : index
    %85 = vector.load %arg7[%c7, %c0_38] : memref<16x128xf32, #tpu.memory_space<vmem>>, vector<1x32xf32>
    %cst_39 = arith.constant dense<0.000000e+00> : vector<32xf32>
    %86 = vector.multi_reduction <add>, %83, %cst_39 [0] : vector<8x32xf32> to vector<32xf32>
    %87 = vector.shape_cast %86 : vector<32xf32> to vector<1x32xf32>
    %cst_40 = arith.constant 8.000000e+00 : f32
    %88 = vector.broadcast %cst_40 : f32 to vector<1x32xf32>
    %89 = arith.divf %87, %88 : vector<1x32xf32>
    %90 = arith.mulf %83, %83 : vector<8x32xf32>
    %cst_41 = arith.constant dense<0.000000e+00> : vector<32xf32>
    %91 = vector.multi_reduction <add>, %90, %cst_41 [0] : vector<8x32xf32> to vector<32xf32>
    %92 = vector.shape_cast %91 : vector<32xf32> to vector<1x32xf32>
    %cst_42 = arith.constant 8.000000e+00 : f32
    %93 = vector.broadcast %cst_42 : f32 to vector<1x32xf32>
    %94 = arith.divf %92, %93 : vector<1x32xf32>
    %95 = arith.mulf %89, %89 : vector<1x32xf32>
    %96 = arith.subf %94, %95 : vector<1x32xf32>
    %cst_43 = arith.constant 9.99999974E-6 : f32
    %97 = vector.broadcast %cst_43 : f32 to vector<1x32xf32>
    %98 = arith.addf %96, %97 : vector<1x32xf32>
    %99 = math.rsqrt %98 : vector<1x32xf32>
    %100 = arith.mulf %84, %99 : vector<1x32xf32>
    %101 = arith.mulf %89, %100 : vector<1x32xf32>
    %102 = arith.subf %85, %101 : vector<1x32xf32>
    %103 = vector.broadcast %100 : vector<1x32xf32> to vector<8x32xf32>
    %104 = arith.mulf %83, %103 : vector<8x32xf32>
    %105 = vector.broadcast %102 : vector<1x32xf32> to vector<8x32xf32>
    %106 = arith.addf %104, %105 : vector<8x32xf32>
    %c0_44 = arith.constant 0 : index
    %c0_45 = arith.constant 0 : index
    %107 = vector.load %arg5[%c0_44, %c0_45] : memref<32x16xf32, #tpu.memory_space<vmem>>, vector<32x16xf32>
    %cst_46 = arith.constant dense<0.000000e+00> : vector<8x16xf32>
    %108 = tpu.matmul %106, %107, %cst_46 {dimension_numbers = #tpu.dot_dimension_numbers<[1], [0], [0], [1], [0, 0, 1, 1], [], []>} : vector<8x32xf32>, vector<32x16xf32>, vector<8x16xf32> -> vector<8x16xf32>
    %c8 = arith.constant 8 : index
    %c0_47 = arith.constant 0 : index
    %109 = vector.load %arg7[%c8, %c0_47] : memref<16x128xf32, #tpu.memory_space<vmem>>, vector<1x16xf32>
    %c9 = arith.constant 9 : index
    %c0_48 = arith.constant 0 : index
    %110 = vector.load %arg7[%c9, %c0_48] : memref<16x128xf32, #tpu.memory_space<vmem>>, vector<1x16xf32>
    %cst_49 = arith.constant dense<0.000000e+00> : vector<16xf32>
    %111 = vector.multi_reduction <add>, %108, %cst_49 [0] : vector<8x16xf32> to vector<16xf32>
    %112 = vector.shape_cast %111 : vector<16xf32> to vector<1x16xf32>
    %cst_50 = arith.constant 8.000000e+00 : f32
    %113 = vector.broadcast %cst_50 : f32 to vector<1x16xf32>
    %114 = arith.divf %112, %113 : vector<1x16xf32>
    %115 = arith.mulf %108, %108 : vector<8x16xf32>
    %cst_51 = arith.constant dense<0.000000e+00> : vector<16xf32>
    %116 = vector.multi_reduction <add>, %115, %cst_51 [0] : vector<8x16xf32> to vector<16xf32>
    %117 = vector.shape_cast %116 : vector<16xf32> to vector<1x16xf32>
    %cst_52 = arith.constant 8.000000e+00 : f32
    %118 = vector.broadcast %cst_52 : f32 to vector<1x16xf32>
    %119 = arith.divf %117, %118 : vector<1x16xf32>
    %120 = arith.mulf %114, %114 : vector<1x16xf32>
    %121 = arith.subf %119, %120 : vector<1x16xf32>
    %cst_53 = arith.constant 9.99999974E-6 : f32
    %122 = vector.broadcast %cst_53 : f32 to vector<1x16xf32>
    %123 = arith.addf %121, %122 : vector<1x16xf32>
    %124 = math.rsqrt %123 : vector<1x16xf32>
    %125 = arith.mulf %109, %124 : vector<1x16xf32>
    %126 = arith.mulf %114, %125 : vector<1x16xf32>
    %127 = arith.subf %110, %126 : vector<1x16xf32>
    %128 = vector.broadcast %125 : vector<1x16xf32> to vector<8x16xf32>
    %129 = arith.mulf %108, %128 : vector<8x16xf32>
    %130 = vector.broadcast %127 : vector<1x16xf32> to vector<8x16xf32>
    %131 = arith.addf %129, %130 : vector<8x16xf32>
    %c0_54 = arith.constant 0 : index
    %c0_55 = arith.constant 0 : index
    %132 = vector.load %arg6[%c0_54, %c0_55] : memref<16x8xf32, #tpu.memory_space<vmem>>, vector<16x8xf32>
    %cst_56 = arith.constant dense<0.000000e+00> : vector<8x8xf32>
    %133 = tpu.matmul %131, %132, %cst_56 {dimension_numbers = #tpu.dot_dimension_numbers<[1], [0], [0], [1], [0, 0, 1, 1], [], []>} : vector<8x16xf32>, vector<16x8xf32>, vector<8x8xf32> -> vector<8x8xf32>
    %c10 = arith.constant 10 : index
    %c0_57 = arith.constant 0 : index
    %134 = vector.load %arg7[%c10, %c0_57] : memref<16x128xf32, #tpu.memory_space<vmem>>, vector<1x8xf32>
    %135 = vector.broadcast %134 : vector<1x8xf32> to vector<8x8xf32>
    %136 = arith.addf %133, %135 : vector<8x8xf32>
    %cst_58 = arith.constant dense<0xFF800000> : vector<8xf32>
    %137 = vector.multi_reduction <maximumf>, %136, %cst_58 [1] : vector<8x8xf32> to vector<8xf32>
    %138 = vector.shape_cast %137 : vector<8xf32> to vector<8x1xf32>
    %139 = vector.broadcast %138 : vector<8x1xf32> to vector<8x8xf32>
    %140 = arith.subf %136, %139 : vector<8x8xf32>
    %141 = math.exp %140 : vector<8x8xf32>
    %cst_59 = arith.constant dense<0.000000e+00> : vector<8xf32>
    %142 = vector.multi_reduction <add>, %141, %cst_59 [1] : vector<8x8xf32> to vector<8xf32>
    %143 = vector.shape_cast %142 : vector<8xf32> to vector<8x1xf32>
    %144 = tpu.reciprocal %143 : vector<8x1xf32> -> vector<8x1xf32>
    %145 = vector.broadcast %144 : vector<8x1xf32> to vector<8x8xf32>
    %146 = arith.mulf %141, %145 : vector<8x8xf32>
    %c0_60 = arith.constant 0 : index
    %c0_61 = arith.constant 0 : index
    %147 = vector.load %arg8[%c0_60, %c0_61] : memref<8x8xf32, #tpu.memory_space<vmem>>, vector<8x8xf32>
    tpu.vector_store %arg8[%c0_60, %c0_61], %146 {strides = array<i32>} : memref<8x8xf32, #tpu.memory_space<vmem>>, vector<8x8xf32>,
    return
  }
}

</mosaic_0001>

<llo_original>
// kernel: tpu_custom_call.1
$region0: #{tpu_custom_call.1}
  #allocation0 [shape = 'u32[]', space=smem, size = 0x4, offset = 0x4, fixed_abs, tag = 'smem constant byte address 0x4 - core index']
  #allocation1 [shape = 'u32[144,128]{1,0:T(1,128)}', space=vmem, size = 0x12000, scoped, tag = 'internal scratch']
  %s0 = inlined_call_operand.hbm [shape: f32[8,32], index: 0, kind: input, shape index: {}]
  %s1 = inlined_call_operand.vmem [shape: f32[32,64], index: 1, kind: input, shape index: {}]
  %s2 = inlined_call_operand.vmem [shape: f32[64,64], index: 2, kind: input, shape index: {}]
  %s3 = inlined_call_operand.vmem [shape: f32[64,32], index: 3, kind: input, shape index: {}]
  %s4 = inlined_call_operand.vmem [shape: f32[32,32], index: 4, kind: input, shape index: {}]
  %s5 = inlined_call_operand.vmem [shape: f32[32,16], index: 5, kind: input, shape index: {}]
  %s6 = inlined_call_operand.vmem [shape: f32[16,8], index: 6, kind: input, shape index: {}]
  %s7 = inlined_call_operand.vmem [shape: f32[16,128], index: 7, kind: input, shape index: {}]
  %s8 = inlined_call_operand.hbm [shape: f32[8,8], index: 8, kind: output, shape index: {}]
  %s9 = sld [smem:[#allocation0]]
  $region46: #{tpu_custom_call.1} parent=0
    _
  %s11 = ssub.s32 1, %s9
  %s12 = scalar_select 0, %s11, %s9
  $region1: #{tpu_custom_call.1} parent=0
    #allocation2 [shape = 'u8[4096]{0}', space=vmem, size = 0x1000, scoped, tag = 'input window, operand 0, single buffered']
    #allocation3 [shape = 's32[1]{0}', space=sflag, size = 0x4, scoped, tag = 'scoped memory for tpu_custom_call.1']
    #allocation4 [shape = 's32[1]{0}', space=sflag, size = 0x4, scoped, tag = 'scoped memory for tpu_custom_call.1']
    #allocation5 [shape = 'u8[4096]{0}', space=vmem, size = 0x1000, scoped, tag = 'output window, operand 0, single buffered']
    %13 = vsyncpa [#allocation3], 0
    %14 = vsyncpa [#allocation4], 0
    // Predicated region
    $region2: #{tpu_custom_call.1} parent=1 // pred_check
      _
    $region3: #{tpu_custom_call.1} parent=1 // pred_check_branch
      %16 = sbr.rel (0) target = $region5
    $region4: #{tpu_custom_call.1} parent=1 // pred_region
      %s18 = ssub.s32 128, 128
      %19 = vsyncadd [#allocation3], %s18
      %s21 = sshll.u32 [#allocation2], 4
      %s22 = int_to_ptr.vmem [resolvable:$true] %s21
      %24 = dma.hbm_to_vmem [thread:$0]  %s0, 128, %s22, [#allocation3]
    $region5: #{tpu_custom_call.1} parent=1 // pred_fallthru
      _
    // Predicated region
    $region6: #{tpu_custom_call.1} parent=1 // pred_check
      _
    $region7: #{tpu_custom_call.1} parent=1 // pred_check_branch
      %26 = sbr.rel (0) target = $region9
    $region8: #{tpu_custom_call.1} parent=1 // pred_region
      _
    $region9: #{tpu_custom_call.1} parent=1 // pred_fallthru
      _
    // Predicated region
    $region10: #{tpu_custom_call.1} parent=1 // pred_check
      _
    $region11: #{tpu_custom_call.1} parent=1 // pred_check_branch
      %28 = sbr.rel (0) target = $region13
    $region12: #{tpu_custom_call.1} parent=1 // pred_region
      _
    $region13: #{tpu_custom_call.1} parent=1 // pred_fallthru
      _
    // Predicated region
    $region14: #{tpu_custom_call.1} parent=1 // pred_check
      _
    $region15: #{tpu_custom_call.1} parent=1 // pred_check_branch
      %30 = sbr.rel (0) target = $region17
    $region16: #{tpu_custom_call.1} parent=1 // pred_region
      _
    $region17: #{tpu_custom_call.1} parent=1 // pred_fallthru
      _
    // Predicated region
    $region18: #{tpu_custom_call.1} parent=1 // pred_check
      _
    $region19: #{tpu_custom_call.1} parent=1 // pred_check_branch
      %32 = sbr.rel (0) target = $region21
    $region20: #{tpu_custom_call.1} parent=1 // pred_region
      _
    $region21: #{tpu_custom_call.1} parent=1 // pred_fallthru
      _
    // Predicated region
    $region22: #{tpu_custom_call.1} parent=1 // pred_check
      _
    $region23: #{tpu_custom_call.1} parent=1 // pred_check_branch
      %34 = sbr.rel (0) target = $region25
    $region24: #{tpu_custom_call.1} parent=1 // pred_region
      _
    $region25: #{tpu_custom_call.1} parent=1 // pred_fallthru
      _
    // Predicated region
    $region26: #{tpu_custom_call.1} parent=1 // pred_check
      _
    $region27: #{tpu_custom_call.1} parent=1 // pred_check_branch
      %36 = sbr.rel (0) target = $region29
    $region28: #{tpu_custom_call.1} parent=1 // pred_region
      _
    $region29: #{tpu_custom_call.1} parent=1 // pred_fallthru
      _
    // Predicated region
    $region30: #{tpu_custom_call.1} parent=1 // pred_check
      _
    $region31: #{tpu_custom_call.1} parent=1 // pred_check_branch
      %38 = sbr.rel (0) target = $region33
    $region32: #{tpu_custom_call.1} parent=1 // pred_region
      _
    $region33: #{tpu_custom_call.1} parent=1 // pred_fallthru
      _
    // Predicated region
    $region34: #{tpu_custom_call.1} parent=1 // pred_check
      _
    $region35: #{tpu_custom_call.1} parent=1 // pred_check_branch
      %40 = sbr.rel (0) target = $region37
    $region36: #{tpu_custom_call.1} parent=1 // pred_region
      %41 = dma.done [#allocation3], 128
    $region37: #{tpu_custom_call.1} parent=1 // pred_fallthru
      _
    %v42 = vld [vmem:[#allocation2] sm:$0xff]
    %v43 = vld [vmem:[%s1] sm:$0xff]
    %v44 = vld [vmem:[%s1 + $0x8] sm:$0xff]
    %v45 = vld [vmem:[%s1 + $0x10] sm:$0xff]
    %v46 = vld [vmem:[%s1 + $0x18] sm:$0xff]
    %vm47 = vcmask 261120
    %v49 = vsel %vm47, %v42, 0
    %51 = vmatprep.subr.mxu0 0.0
    %52 = vmatpush1.msra.mxu0 %v43
    %53 = vmatprep.subr.mxu0 0.0
    %54 = vmatpush1.msra.mxu0 %v44
    %55 = vmatprep.subr.mxu0 0.0
    %56 = vmatpush1.msra.mxu0 %v45
    %57 = vmatprep.subr.mxu0 0.0
    %58 = vmatpush1.msra.mxu0 %v46
    %59 = vmatprep.subr.mxu0 0.0
    %60 = vmatpush1.msra.mxu0 0.0
    %61 = vmatprep.subr.mxu0 0.0
    %62 = vmatpush1.msra.mxu0 0.0
    %63 = vmatprep.subr.mxu0 0.0
    %64 = vmatpush1.msra.mxu0 0.0
    %65 = vmatprep.subr.mxu0 0.0
    %66 = vmatpush1.msra.mxu0 0.0
    %67 = vmatprep.subr.mxu0 0.0
    %68 = vmatpush1.msra.mxu0 0.0
    %69 = vmatprep.subr.mxu0 0.0
    %70 = vmatpush1.msra.mxu0 0.0
    %71 = vmatprep.subr.mxu0 0.0
    %72 = vmatpush1.msra.mxu0 0.0
    %73 = vmatprep.subr.mxu0 0.0
    %74 = vmatpush1.msra.mxu0 0.0
    %75 = vmatprep.subr.mxu0 0.0
    %76 = vmatpush1.msra.mxu0 0.0
    %77 = vmatprep.subr.mxu0 0.0
    %78 = vmatpush1.msra.mxu0 0.0
    %79 = vmatprep.subr.mxu0 0.0
    %80 = vmatpush1.msra.mxu0 0.0
    %81 = vmatprep.subr.mxu0 0.0
    %82 = vmatpush1.msra.mxu0 0.0
    %83 = vmatprep.subr.mxu0 0.0
    %84 = vmatpush1.msra.mxu0 0.0
    %85 = vmatprep.subr.mxu0 0.0
    %86 = vmatpush1.msra.mxu0 0.0
    %87 = vmatprep.subr.mxu0 0.0
    %88 = vmatpush1.msra.mxu0 0.0
    %89 = vmatprep.subr.mxu0 0.0
    %90 = vmatpush1.msra.mxu0 0.0
    %91 = vmatprep.subr.mxu0 0.0
    %92 = vmatpush1.msra.mxu0 0.0
    %93 = vmatprep.subr.mxu0 0.0
    %94 = vmatpush1.msra.mxu0 0.0
    %95 = vmatprep.subr.mxu0 0.0
    %96 = vmatpush1.msra.mxu0 0.0
    %97 = vmatprep.subr.mxu0 0.0
    %98 = vmatpush1.msra.mxu0 0.0
    %99 = vmatprep.subr.mxu0 0.0
    %100 = vmatpush1.msra.mxu0 0.0
    %101 = vmatprep.subr.mxu0 0.0
    %102 = vmatpush1.msra.mxu0 0.0
    %103 = vmatprep.subr.mxu0 0.0
    %104 = vmatpush1.msra.mxu0 0.0
    %105 = vmatprep.subr.mxu0 0.0
    %106 = vmatpush1.msra.mxu0 0.0
    %107 = vmatprep.subr.mxu0 0.0
    %108 = vmatpush1.msra.mxu0 0.0
    %109 = vmatprep.subr.mxu0 0.0
    %110 = vmatpush1.msra.mxu0 0.0
    %111 = vmatprep.subr.mxu0 0.0
    %112 = vmatpush1.msra.mxu0 0.0
    %113 = vmatprep.subr.mxu0 0.0
    %114 = vmatpush1.msra.mxu0 0.0
    %115 = vmatprep.mubr.f32.mxu0 0.0
    %116 = vmatmul.mubr.f32.gmra.mrb[0].mxu0 %v49
    %v117 = vpop.f32.mrb[0].mxu0
    %v118 = vadd.f32 0.0, %v117
    %v119 = vpop.f32.mrb[0].mxu0
    %120 = vdwg.mxu0
    %v121 = vld [vmem:[%s7] sm:$0x1]
    %v122 = vld [vmem:[%s7 + $0x1] sm:$0x1]
    %vm123 = vcmask 523264
    %v124 = vsel %vm123, %v118, 0.0
    %v125 = vrot.slane %v124, 4
    %v126 = vadd.f32 %v124, %v125
    %v127 = vrot.slane %v126, 2
    %v128 = vadd.f32 %v126, %v127
    %v129 = vrot.slane %v128, 1
    %v130 = vadd.f32 %v128, %v129
    %v131 = vrcp.pop 8.0
    %v132 = vmul.f32 %v130, %v131
    %v133 = vmul.f32 %v118, %v118
    %v134 = vsel %vm123, %v133, 0.0
    %v135 = vrot.slane %v134, 4
    %v136 = vadd.f32 %v134, %v135
    %v137 = vrot.slane %v136, 2
    %v138 = vadd.f32 %v136, %v137
    %v139 = vrot.slane %v138, 1
    %v140 = vadd.f32 %v138, %v139
    %v141 = vmul.f32 %v140, %v131
    %v142 = vmul.f32 %v132, %v132
    %v143 = vsub.f32 %v141, %v142
    %v144 = vadd.f32 %v143, 1e-05
    %v145 = vrsqrt.pop %v144
    %v146 = vmul.f32 %v121, %v145
    %v147 = vmul.f32 %v132, %v146
    %v148 = vsub.f32 %v122, %v147
    %v149 = vlaneseq
    %v150 = vshrl.u32 %v149, 7
    %v151 = vsub.s32 0, %v150
    %v152 = vrot.slane %v146, %v151
    %v153 = vmul.f32 %v118, %v152
    %v154 = vlaneseq
    %v155 = vshrl.u32 %v154, 7
    %v156 = vsub.s32 0, %v155
    %v157 = vrot.slane %v148, %v156
    %v158 = vadd.f32 %v153, %v157
    %v159 = vmax.f32 %v158, 0.0
    %v160 = vld [vmem:[%s2] sm:$0xff]
    %v161 = vld [vmem:[%s2 + $0x8] sm:$0xff]
    %v162 = vld [vmem:[%s2 + $0x10] sm:$0xff]
    %v163 = vld [vmem:[%s2 + $0x18] sm:$0xff]
    %v164 = vld [vmem:[%s2 + $0x20] sm:$0xff]
    %v165 = vld [vmem:[%s2 + $0x28] sm:$0xff]
    %v166 = vld [vmem:[%s2 + $0x30] sm:$0xff]
    %v167 = vld [vmem:[%s2 + $0x38] sm:$0xff]
    %v169 = vsel %vm123, %v159, 0
    %171 = vmatprep.subr.mxu0 0.0
    %172 = vmatpush1.msra.mxu0 %v160
    %173 = vmatprep.subr.mxu0 0.0
    %174 = vmatpush1.msra.mxu0 %v161
    %175 = vmatprep.subr.mxu0 0.0
    %176 = vmatpush1.msra.mxu0 %v162
    %177 = vmatprep.subr.mxu0 0.0
    %178 = vmatpush1.msra.mxu0 %v163
    %179 = vmatprep.subr.mxu0 0.0
    %180 = vmatpush1.msra.mxu0 %v164
    %181 = vmatprep.subr.mxu0 0.0
    %182 = vmatpush1.msra.mxu0 %v165
    %183 = vmatprep.subr.mxu0 0.0
    %184 = vmatpush1.msra.mxu0 %v166
    %185 = vmatprep.subr.mxu0 0.0
    %186 = vmatpush1.msra.mxu0 %v167
    %187 = vmatprep.subr.mxu0 0.0
    %188 = vmatpush1.msra.mxu0 0.0
    %189 = vmatprep.subr.mxu0 0.0
    %190 = vmatpush1.msra.mxu0 0.0
    %191 = vmatprep.subr.mxu0 0.0
    %192 = vmatpush1.msra.mxu0 0.0
    %193 = vmatprep.subr.mxu0 0.0
    %194 = vmatpush1.msra.mxu0 0.0
    %195 = vmatprep.subr.mxu0 0.0
    %196 = vmatpush1.msra.mxu0 0.0
    %197 = vmatprep.subr.mxu0 0.0
    %198 = vmatpush1.msra.mxu0 0.0
    %199 = vmatprep.subr.mxu0 0.0
    %200 = vmatpush1.msra.mxu0 0.0
    %201 = vmatprep.subr.mxu0 0.0
    %202 = vmatpush1.msra.mxu0 0.0
    %203 = vmatprep.subr.mxu0 0.0
    %204 = vmatpush1.msra.mxu0 0.0
    %205 = vmatprep.subr.mxu0 0.0
    %206 = vmatpush1.msra.mxu0 0.0
    %207 = vmatprep.subr.mxu0 0.0
    %208 = vmatpush1.msra.mxu0 0.0
    %209 = vmatprep.subr.mxu0 0.0
    %210 = vmatpush1.msra.mxu0 0.0
    %211 = vmatprep.subr.mxu0 0.0
    %212 = vmatpush1.msra.mxu0 0.0
    %213 = vmatprep.subr.mxu0 0.0
    %214 = vmatpush1.msra.mxu0 0.0
    %215 = vmatprep.subr.mxu0 0.0
    %216 = vmatpush1.msra.mxu0 0.0
    %217 = vmatprep.subr.mxu0 0.0
    %218 = vmatpush1.msra.mxu0 0.0
    %219 = vmatprep.subr.mxu0 0.0
    %220 = vmatpush1.msra.mxu0 0.0
    %221 = vmatprep.subr.mxu0 0.0
    %222 = vmatpush1.msra.mxu0 0.0
    %223 = vmatprep.subr.mxu0 0.0
    %224 = vmatpush1.msra.mxu0 0.0
    %225 = vmatprep.subr.mxu0 0.0
    %226 = vmatpush1.msra.mxu0 0.0
    %227 = vmatprep.subr.mxu0 0.0
    %228 = vmatpush1.msra.mxu0 0.0
    %229 = vmatprep.subr.mxu0 0.0
    %230 = vmatpush1.msra.mxu0 0.0
    %231 = vmatprep.subr.mxu0 0.0
    %232 = vmatpush1.msra.mxu0 0.0
    %233 = vmatprep.subr.mxu0 0.0
    %234 = vmatpush1.msra.mxu0 0.0
    %235 = vmatprep.mubr.f32.mxu0 0.0
    %236 = vmatmul.mubr.f32.gmra.mrb[0].mxu0 %v169
    %v237 = vpop.f32.mrb[0].mxu0
    %v238 = vadd.f32 0.0, %v237
    %v239 = vpop.f32.mrb[0].mxu0
    %240 = vdwg.mxu0
    %v241 = vld [vmem:[%s7 + $0x2] sm:$0x1]
    %v242 = vld [vmem:[%s7 + $0x3] sm:$0x1]
    %v243 = vsel %vm123, %v238, 0.0
    %v244 = vrot.slane %v243, 4
    %v245 = vadd.f32 %v243, %v244
    %v246 = vrot.slane %v245, 2
    %v247 = vadd.f32 %v245, %v246
    %v248 = vrot.slane %v247, 1
    %v249 = vadd.f32 %v247, %v248
    %v250 = vmul.f32 %v249, %v131
    %v251 = vmul.f32 %v238, %v238
    %v252 = vsel %vm123, %v251, 0.0
    %v253 = vrot.slane %v252, 4
    %v254 = vadd.f32 %v252, %v253
    %v255 = vrot.slane %v254, 2
    %v256 = vadd.f32 %v254, %v255
    %v257 = vrot.slane %v256, 1
    %v258 = vadd.f32 %v256, %v257
    %v259 = vmul.f32 %v258, %v131
    %v260 = vmul.f32 %v250, %v250
    %v261 = vsub.f32 %v259, %v260
    %v262 = vadd.f32 %v261, 1e-05
    %v263 = vrsqrt.pop %v262
    %v264 = vmul.f32 %v241, %v263
    %v265 = vmul.f32 %v250, %v264
    %v266 = vsub.f32 %v242, %v265
    %v267 = vlaneseq
    %v268 = vshrl.u32 %v267, 7
    %v269 = vsub.s32 0, %v268
    %v270 = vrot.slane %v264, %v269
    %v271 = vmul.f32 %v238, %v270
    %v272 = vlaneseq
    %v273 = vshrl.u32 %v272, 7
    %v274 = vsub.s32 0, %v273
    %v275 = vrot.slane %v266, %v274
    %v276 = vadd.f32 %v271, %v275
    %v277 = vmax.f32 %v276, 0.0
    %v278 = vld [vmem:[%s3] sm:$0xff]
    %v279 = vld [vmem:[%s3 + $0x8] sm:$0xff]
    %v280 = vld [vmem:[%s3 + $0x10] sm:$0xff]
    %v281 = vld [vmem:[%s3 + $0x18] sm:$0xff]
    %v282 = vld [vmem:[%s3 + $0x20] sm:$0xff]
    %v283 = vld [vmem:[%s3 + $0x28] sm:$0xff]
    %v284 = vld [vmem:[%s3 + $0x30] sm:$0xff]
    %v285 = vld [vmem:[%s3 + $0x38] sm:$0xff]
    %v287 = vsel %vm123, %v277, 0
    %289 = vmatprep.subr.mxu0 0.0
    %290 = vmatpush1.msra.mxu0 %v278
    %291 = vmatprep.subr.mxu0 0.0
    %292 = vmatpush1.msra.mxu0 %v279
    %293 = vmatprep.subr.mxu0 0.0
    %294 = vmatpush1.msra.mxu0 %v280
    %295 = vmatprep.subr.mxu0 0.0
    %296 = vmatpush1.msra.mxu0 %v281
    %297 = vmatprep.subr.mxu0 0.0
    %298 = vmatpush1.msra.mxu0 %v282
    %299 = vmatprep.subr.mxu0 0.0
    %300 = vmatpush1.msra.mxu0 %v283
    %301 = vmatprep.subr.mxu0 0.0
    %302 = vmatpush1.msra.mxu0 %v284
    %303 = vmatprep.subr.mxu0 0.0
    %304 = vmatpush1.msra.mxu0 %v285
    %305 = vmatprep.subr.mxu0 0.0
    %306 = vmatpush1.msra.mxu0 0.0
    %307 = vmatprep.subr.mxu0 0.0
    %308 = vmatpush1.msra.mxu0 0.0
    %309 = vmatprep.subr.mxu0 0.0
    %310 = vmatpush1.msra.mxu0 0.0
    %311 = vmatprep.subr.mxu0 0.0
    %312 = vmatpush1.msra.mxu0 0.0
    %313 = vmatprep.subr.mxu0 0.0
    %314 = vmatpush1.msra.mxu0 0.0
    %315 = vmatprep.subr.mxu0 0.0
    %316 = vmatpush1.msra.mxu0 0.0
    %317 = vmatprep.subr.mxu0 0.0
    %318 = vmatpush1.msra.mxu0 0.0
    %319 = vmatprep.subr.mxu0 0.0
    %320 = vmatpush1.msra.mxu0 0.0
    %321 = vmatprep.subr.mxu0 0.0
    %322 = vmatpush1.msra.mxu0 0.0
    %323 = vmatprep.subr.mxu0 0.0
    %324 = vmatpush1.msra.mxu0 0.0
    %325 = vmatprep.subr.mxu0 0.0
    %326 = vmatpush1.msra.mxu0 0.0
    %327 = vmatprep.subr.mxu0 0.0
    %328 = vmatpush1.msra.mxu0 0.0
    %329 = vmatprep.subr.mxu0 0.0
    %330 = vmatpush1.msra.mxu0 0.0
    %331 = vmatprep.subr.mxu0 0.0
    %332 = vmatpush1.msra.mxu0 0.0
    %333 = vmatprep.subr.mxu0 0.0
    %334 = vmatpush1.msra.mxu0 0.0
    %335 = vmatprep.subr.mxu0 0.0
    %336 = vmatpush1.msra.mxu0 0.0
    %337 = vmatprep.subr.mxu0 0.0
    %338 = vmatpush1.msra.mxu0 0.0
    %339 = vmatprep.subr.mxu0 0.0
    %340 = vmatpush1.msra.mxu0 0.0
    %341 = vmatprep.subr.mxu0 0.0
    %342 = vmatpush1.msra.mxu0 0.0
    %343 = vmatprep.subr.mxu0 0.0
    %344 = vmatpush1.msra.mxu0 0.0
    %345 = vmatprep.subr.mxu0 0.0
    %346 = vmatpush1.msra.mxu0 0.0
    %347 = vmatprep.subr.mxu0 0.0
    %348 = vmatpush1.msra.mxu0 0.0
    %349 = vmatprep.subr.mxu0 0.0
    %350 = vmatpush1.msra.mxu0 0.0
    %351 = vmatprep.subr.mxu0 0.0
    %352 = vmatpush1.msra.mxu0 0.0
    %353 = vmatprep.mubr.f32.mxu0 0.0
    %354 = vmatmul.mubr.f32.gmra.mrb[0].mxu0 %v287
    %v355 = vpop.f32.mrb[0].mxu0
    %v356 = vadd.f32 0.0, %v355
    %v357 = vpop.f32.mrb[0].mxu0
    %358 = vdwg.mxu0
    %v359 = vld [vmem:[%s7 + $0x4] sm:$0x1]
    %v360 = vld [vmem:[%s7 + $0x5] sm:$0x1]
    %v361 = vsel %vm47, %v356, 0.0
    %v362 = vrot.slane %v361, 4
    %v363 = vadd.f32 %v361, %v362
    %v364 = vrot.slane %v363, 2
    %v365 = vadd.f32 %v363, %v364
    %v366 = vrot.slane %v365, 1
    %v367 = vadd.f32 %v365, %v366
    %v368 = vmul.f32 %v367, %v131
    %v369 = vmul.f32 %v356, %v356
    %v370 = vsel %vm47, %v369, 0.0
    %v371 = vrot.slane %v370, 4
    %v372 = vadd.f32 %v370, %v371
    %v373 = vrot.slane %v372, 2
    %v374 = vadd.f32 %v372, %v373
    %v375 = vrot.slane %v374, 1
    %v376 = vadd.f32 %v374, %v375
    %v377 = vmul.f32 %v376, %v131
    %v378 = vmul.f32 %v368, %v368
    %v379 = vsub.f32 %v377, %v378
    %v380 = vadd.f32 %v379, 1e-05
    %v381 = vrsqrt.pop %v380
    %v382 = vmul.f32 %v359, %v381
    %v383 = vmul.f32 %v368, %v382
    %v384 = vsub.f32 %v360, %v383
    %v385 = vlaneseq
    %v386 = vshrl.u32 %v385, 7
    %v387 = vsub.s32 0, %v386
    %v388 = vrot.slane %v382, %v387
    %v389 = vmul.f32 %v356, %v388
    %v390 = vlaneseq
    %v391 = vshrl.u32 %v390, 7
    %v392 = vsub.s32 0, %v391
    %v393 = vrot.slane %v384, %v392
    %v394 = vadd.f32 %v389, %v393
    %v395 = vmax.f32 %v394, 0.0
    %v396 = vld [vmem:[%s4] sm:$0xff]
    %v397 = vld [vmem:[%s4 + $0x8] sm:$0xff]
    %v398 = vld [vmem:[%s4 + $0x10] sm:$0xff]
    %v399 = vld [vmem:[%s4 + $0x18] sm:$0xff]
    %v401 = vsel %vm47, %v395, 0
    %403 = vmatprep.subr.mxu0 0.0
    %404 = vmatpush1.msra.mxu0 %v396
    %405 = vmatprep.subr.mxu0 0.0
    %406 = vmatpush1.msra.mxu0 %v397
    %407 = vmatprep.subr.mxu0 0.0
    %408 = vmatpush1.msra.mxu0 %v398
    %409 = vmatprep.subr.mxu0 0.0
    %410 = vmatpush1.msra.mxu0 %v399
    %411 = vmatprep.subr.mxu0 0.0
    %412 = vmatpush1.msra.mxu0 0.0
    %413 = vmatprep.subr.mxu0 0.0
    %414 = vmatpush1.msra.mxu0 0.0
    %415 = vmatprep.subr.mxu0 0.0
    %416 = vmatpush1.msra.mxu0 0.0
    %417 = vmatprep.subr.mxu0 0.0
    %418 = vmatpush1.msra.mxu0 0.0
    %419 = vmatprep.subr.mxu0 0.0
    %420 = vmatpush1.msra.mxu0 0.0
    %421 = vmatprep.subr.mxu0 0.0
    %422 = vmatpush1.msra.mxu0 0.0
    %423 = vmatprep.subr.mxu0 0.0
    %424 = vmatpush1.msra.mxu0 0.0
    %425 = vmatprep.subr.mxu0 0.0
    %426 = vmatpush1.msra.mxu0 0.0
    %427 = vmatprep.subr.mxu0 0.0
    %428 = vmatpush1.msra.mxu0 0.0
    %429 = vmatprep.subr.mxu0 0.0
    %430 = vmatpush1.msra.mxu0 0.0
    %431 = vmatprep.subr.mxu0 0.0
    %432 = vmatpush1.msra.mxu0 0.0
    %433 = vmatprep.subr.mxu0 0.0
    %434 = vmatpush1.msra.mxu0 0.0
    %435 = vmatprep.subr.mxu0 0.0
    %436 = vmatpush1.msra.mxu0 0.0
    %437 = vmatprep.subr.mxu0 0.0
    %438 = vmatpush1.msra.mxu0 0.0
    %439 = vmatprep.subr.mxu0 0.0
    %440 = vmatpush1.msra.mxu0 0.0
    %441 = vmatprep.subr.mxu0 0.0
    %442 = vmatpush1.msra.mxu0 0.0
    %443 = vmatprep.subr.mxu0 0.0
    %444 = vmatpush1.msra.mxu0 0.0
    %445 = vmatprep.subr.mxu0 0.0
    %446 = vmatpush1.msra.mxu0 0.0
    %447 = vmatprep.subr.mxu0 0.0
    %448 = vmatpush1.msra.mxu0 0.0
    %449 = vmatprep.subr.mxu0 0.0
    %450 = vmatpush1.msra.mxu0 0.0
    %451 = vmatprep.subr.mxu0 0.0
    %452 = vmatpush1.msra.mxu0 0.0
    %453 = vmatprep.subr.mxu0 0.0
    %454 = vmatpush1.msra.mxu0 0.0
    %455 = vmatprep.subr.mxu0 0.0
    %456 = vmatpush1.msra.mxu0 0.0
    %457 = vmatprep.subr.mxu0 0.0
    %458 = vmatpush1.msra.mxu0 0.0
    %459 = vmatprep.subr.mxu0 0.0
    %460 = vmatpush1.msra.mxu0 0.0
    %461 = vmatprep.subr.mxu0 0.0
    %462 = vmatpush1.msra.mxu0 0.0
    %463 = vmatprep.subr.mxu0 0.0
    %464 = vmatpush1.msra.mxu0 0.0
    %465 = vmatprep.subr.mxu0 0.0
    %466 = vmatpush1.msra.mxu0 0.0
    %467 = vmatprep.mubr.f32.mxu0 0.0
    %468 = vmatmul.mubr.f32.gmra.mrb[0].mxu0 %v401
    %v469 = vpop.f32.mrb[0].mxu0
    %v470 = vadd.f32 0.0, %v469
    %v471 = vpop.f32.mrb[0].mxu0
    %472 = vdwg.mxu0
    %v473 = vld [vmem:[%s7 + $0x6] sm:$0x1]
    %v474 = vld [vmem:[%s7 + $0x7] sm:$0x1]
    %v475 = vsel %vm47, %v470, 0.0
    %v476 = vrot.slane %v475, 4
    %v477 = vadd.f32 %v475, %v476
    %v478 = vrot.slane %v477, 2
    %v479 = vadd.f32 %v477, %v478
    %v480 = vrot.slane %v479, 1
    %v481 = vadd.f32 %v479, %v480
    %v482 = vmul.f32 %v481, %v131
    %v483 = vmul.f32 %v470, %v470
    %v484 = vsel %vm47, %v483, 0.0
    %v485 = vrot.slane %v484, 4
    %v486 = vadd.f32 %v484, %v485
    %v487 = vrot.slane %v486, 2
    %v488 = vadd.f32 %v486, %v487
    %v489 = vrot.slane %v488, 1
    %v490 = vadd.f32 %v488, %v489
    %v491 = vmul.f32 %v490, %v131
    %v492 = vmul.f32 %v482, %v482
    %v493 = vsub.f32 %v491, %v492
    %v494 = vadd.f32 %v493, 1e-05
    %v495 = vrsqrt.pop %v494
    %v496 = vmul.f32 %v473, %v495
    %v497 = vmul.f32 %v482, %v496
    %v498 = vsub.f32 %v474, %v497
    %v499 = vlaneseq
    %v500 = vshrl.u32 %v499, 7
    %v501 = vsub.s32 0, %v500
    %v502 = vrot.slane %v496, %v501
    %v503 = vmul.f32 %v470, %v502
    %v504 = vlaneseq
    %v505 = vshrl.u32 %v504, 7
    %v506 = vsub.s32 0, %v505
    %v507 = vrot.slane %v498, %v506
    %v508 = vadd.f32 %v503, %v507
    %v509 = vld [vmem:[%s5] sm:$0xff]
    %v510 = vld [vmem:[%s5 + $0x8] sm:$0xff]
    %v511 = vld [vmem:[%s5 + $0x10] sm:$0xff]
    %v512 = vld [vmem:[%s5 + $0x18] sm:$0xff]
    %v514 = vsel %vm47, %v508, 0
    %516 = vmatprep.subr.mxu0 0.0
    %517 = vmatpush1.msra.mxu0 %v509
    %518 = vmatprep.subr.mxu0 0.0
    %519 = vmatpush1.msra.mxu0 %v510
    %520 = vmatprep.subr.mxu0 0.0
    %521 = vmatpush1.msra.mxu0 %v511
    %522 = vmatprep.subr.mxu0 0.0
    %523 = vmatpush1.msra.mxu0 %v512
    %524 = vmatprep.subr.mxu0 0.0
    %525 = vmatpush1.msra.mxu0 0.0
    %526 = vmatprep.subr.mxu0 0.0
    %527 = vmatpush1.msra.mxu0 0.0
    %528 = vmatprep.subr.mxu0 0.0
    %529 = vmatpush1.msra.mxu0 0.0
    %530 = vmatprep.subr.mxu0 0.0
    %531 = vmatpush1.msra.mxu0 0.0
    %532 = vmatprep.subr.mxu0 0.0
    %533 = vmatpush1.msra.mxu0 0.0
    %534 = vmatprep.subr.mxu0 0.0
    %535 = vmatpush1.msra.mxu0 0.0
    %536 = vmatprep.subr.mxu0 0.0
    %537 = vmatpush1.msra.mxu0 0.0
    %538 = vmatprep.subr.mxu0 0.0
    %539 = vmatpush1.msra.mxu0 0.0
    %540 = vmatprep.subr.mxu0 0.0
    %541 = vmatpush1.msra.mxu0 0.0
    %542 = vmatprep.subr.mxu0 0.0
    %543 = vmatpush1.msra.mxu0 0.0
    %544 = vmatprep.subr.mxu0 0.0
    %545 = vmatpush1.msra.mxu0 0.0
    %546 = vmatprep.subr.mxu0 0.0
    %547 = vmatpush1.msra.mxu0 0.0
    %548 = vmatprep.subr.mxu0 0.0
    %549 = vmatpush1.msra.mxu0 0.0
    %550 = vmatprep.subr.mxu0 0.0
    %551 = vmatpush1.msra.mxu0 0.0
    %552 = vmatprep.subr.mxu0 0.0
    %553 = vmatpush1.msra.mxu0 0.0
    %554 = vmatprep.subr.mxu0 0.0
    %555 = vmatpush1.msra.mxu0 0.0
    %556 = vmatprep.subr.mxu0 0.0
    %557 = vmatpush1.msra.mxu0 0.0
    %558 = vmatprep.subr.mxu0 0.0
    %559 = vmatpush1.msra.mxu0 0.0
    %560 = vmatprep.subr.mxu0 0.0
    %561 = vmatpush1.msra.mxu0 0.0
    %562 = vmatprep.subr.mxu0 0.0
    %563 = vmatpush1.msra.mxu0 0.0
    %564 = vmatprep.subr.mxu0 0.0
    %565 = vmatpush1.msra.mxu0 0.0
    %566 = vmatprep.subr.mxu0 0.0
    %567 = vmatpush1.msra.mxu0 0.0
    %568 = vmatprep.subr.mxu0 0.0
    %569 = vmatpush1.msra.mxu0 0.0
    %570 = vmatprep.subr.mxu0 0.0
    %571 = vmatpush1.msra.mxu0 0.0
    %572 = vmatprep.subr.mxu0 0.0
    %573 = vmatpush1.msra.mxu0 0.0
    %574 = vmatprep.subr.mxu0 0.0
    %575 = vmatpush1.msra.mxu0 0.0
    %576 = vmatprep.subr.mxu0 0.0
    %577 = vmatpush1.msra.mxu0 0.0
    %578 = vmatprep.subr.mxu0 0.0
    %579 = vmatpush1.msra.mxu0 0.0
    %580 = vmatprep.mubr.f32.mxu0 0.0
    %581 = vmatmul.mubr.f32.gmra.mrb[0].mxu0 %v514
    %v582 = vpop.f32.mrb[0].mxu0
    %v583 = vadd.f32 0.0, %v582
    %v584 = vpop.f32.mrb[0].mxu0
    %585 = vdwg.mxu0
    %v586 = vld [vmem:[%s7 + $0x8] sm:$0x1]
    %v587 = vld [vmem:[%s7 + $0x9] sm:$0x1]
    %vm588 = vcmask 130048
    %v589 = vsel %vm588, %v583, 0.0
    %v590 = vrot.slane %v589, 4
    %v591 = vadd.f32 %v589, %v590
    %v592 = vrot.slane %v591, 2
    %v593 = vadd.f32 %v591, %v592
    %v594 = vrot.slane %v593, 1
    %v595 = vadd.f32 %v593, %v594
    %v596 = vmul.f32 %v595, %v131
    %v597 = vmul.f32 %v583, %v583
    %v598 = vsel %vm588, %v597, 0.0
    %v599 = vrot.slane %v598, 4
    %v600 = vadd.f32 %v598, %v599
    %v601 = vrot.slane %v600, 2
    %v602 = vadd.f32 %v600, %v601
    %v603 = vrot.slane %v602, 1
    %v604 = vadd.f32 %v602, %v603
    %v605 = vmul.f32 %v604, %v131
    %v606 = vmul.f32 %v596, %v596
    %v607 = vsub.f32 %v605, %v606
    %v608 = vadd.f32 %v607, 1e-05
    %v609 = vrsqrt.pop %v608
    %v610 = vmul.f32 %v586, %v609
    %v611 = vmul.f32 %v596, %v610
    %v612 = vsub.f32 %v587, %v611
    %v613 = vlaneseq
    %v614 = vshrl.u32 %v613, 7
    %v615 = vsub.s32 0, %v614
    %v616 = vrot.slane %v610, %v615
    %v617 = vmul.f32 %v583, %v616
    %v618 = vlaneseq
    %v619 = vshrl.u32 %v618, 7
    %v620 = vsub.s32 0, %v619
    %v621 = vrot.slane %v612, %v620
    %v622 = vadd.f32 %v617, %v621
    %v623 = vld [vmem:[%s6] sm:$0xff]
    %v624 = vld [vmem:[%s6 + $0x8] sm:$0xff]
    %v625 = vld [vmem:[%s7 + $0xa] sm:$0x1]
    %v626 = vlaneseq
    %v627 = vshrl.u32 %v626, 7
    %v628 = vsub.s32 0, %v627
    %v629 = vrot.slane %v625, %v628
    %v631 = vsel %vm588, %v622, 0
    %633 = vmatprep.subr.mxu0 0.0
    %634 = vmatpush1.msra.mxu0 %v623
    %635 = vmatprep.subr.mxu0 0.0
    %636 = vmatpush1.msra.mxu0 %v624
    %637 = vmatprep.subr.mxu0 0.0
    %638 = vmatpush1.msra.mxu0 0.0
    %639 = vmatprep.subr.mxu0 0.0
    %640 = vmatpush1.msra.mxu0 0.0
    %641 = vmatprep.subr.mxu0 0.0
    %642 = vmatpush1.msra.mxu0 0.0
    %643 = vmatprep.subr.mxu0 0.0
    %644 = vmatpush1.msra.mxu0 0.0
    %645 = vmatprep.subr.mxu0 0.0
    %646 = vmatpush1.msra.mxu0 0.0
    %647 = vmatprep.subr.mxu0 0.0
    %648 = vmatpush1.msra.mxu0 0.0
    %649 = vmatprep.subr.mxu0 0.0
    %650 = vmatpush1.msra.mxu0 0.0
    %651 = vmatprep.subr.mxu0 0.0
    %652 = vmatpush1.msra.mxu0 0.0
    %653 = vmatprep.subr.mxu0 0.0
    %654 = vmatpush1.msra.mxu0 0.0
    %655 = vmatprep.subr.mxu0 0.0
    %656 = vmatpush1.msra.mxu0 0.0
    %657 = vmatprep.subr.mxu0 0.0
    %658 = vmatpush1.msra.mxu0 0.0
    %659 = vmatprep.subr.mxu0 0.0
    %660 = vmatpush1.msra.mxu0 0.0
    %661 = vmatprep.subr.mxu0 0.0
    %662 = vmatpush1.msra.mxu0 0.0
    %663 = vmatprep.subr.mxu0 0.0
    %664 = vmatpush1.msra.mxu0 0.0
    %665 = vmatprep.subr.mxu0 0.0
    %666 = vmatpush1.msra.mxu0 0.0
    %667 = vmatprep.subr.mxu0 0.0
    %668 = vmatpush1.msra.mxu0 0.0
    %669 = vmatprep.subr.mxu0 0.0
    %670 = vmatpush1.msra.mxu0 0.0
    %671 = vmatprep.subr.mxu0 0.0
    %672 = vmatpush1.msra.mxu0 0.0
    %673 = vmatprep.subr.mxu0 0.0
    %674 = vmatpush1.msra.mxu0 0.0
    %675 = vmatprep.subr.mxu0 0.0
    %676 = vmatpush1.msra.mxu0 0.0
    %677 = vmatprep.subr.mxu0 0.0
    %678 = vmatpush1.msra.mxu0 0.0
    %679 = vmatprep.subr.mxu0 0.0
    %680 = vmatpush1.msra.mxu0 0.0
    %681 = vmatprep.subr.mxu0 0.0
    %682 = vmatpush1.msra.mxu0 0.0
    %683 = vmatprep.subr.mxu0 0.0
    %684 = vmatpush1.msra.mxu0 0.0
    %685 = vmatprep.subr.mxu0 0.0
    %686 = vmatpush1.msra.mxu0 0.0
    %687 = vmatprep.subr.mxu0 0.0
    %688 = vmatpush1.msra.mxu0 0.0
    %689 = vmatprep.subr.mxu0 0.0
    %690 = vmatpush1.msra.mxu0 0.0
    %691 = vmatprep.subr.mxu0 0.0
    %692 = vmatpush1.msra.mxu0 0.0
    %693 = vmatprep.subr.mxu0 0.0
    %694 = vmatpush1.msra.mxu0 0.0
    %695 = vmatprep.subr.mxu0 0.0
    %696 = vmatpush1.msra.mxu0 0.0
    %697 = vmatprep.mubr.f32.mxu0 0.0
    %698 = vmatmul.mubr.f32.gmra.mrb[0].mxu0 %v631
    %v699 = vpop.f32.mrb[0].mxu0
    %v700 = vadd.f32 %v629, %v699
    %v701 = vpop.f32.mrb[0].mxu0
    %702 = vdwg.mxu0
    %vm703 = vcmask 64512
    %v704 = vsel %vm703, %v700, -inf
    %705 = vmax.xlane.f32.xlu0 %v704
    %v706 = vpop.xlane.xlu0 %705
    %v707 = vsub.f32 %v700, %v706
    %v708 = vmul.f32 %v707, 1.442695
    %v709 = vpow.pop %v708
    %v710 = vsel %vm703, %v709, 0.0
    %711 = vadd.xlane.f32.xlu0 %v710
    %v712 = vpop.xlane.xlu0 %711
    %v713 = vrcp.pop %v712
    %v714 = vmul.f32 %v709, %v713
    %715 = vst.msk [vmem:[#allocation5] sm:$0xff] %vm703, %v714
    // Predicated region
    $region38: #{tpu_custom_call.1} parent=1 // pred_check
      _
    $region39: #{tpu_custom_call.1} parent=1 // pred_check_branch
      %717 = sbr.rel (0) target = $region41
    $region40: #{tpu_custom_call.1} parent=1 // pred_region
      %s719 = ssub.s32 128, 128
      %720 = vsyncadd [#allocation4], %s719
      %s722 = sshll.u32 [#allocation5], 4
      %s723 = int_to_ptr.vmem [resolvable:$true] %s722
      %725 = dma.vmem_to_hbm [thread:$0]  %s723, 128, %s8, [#allocation4]
    $region41: #{tpu_custom_call.1} parent=1 // pred_fallthru
      _
    // Predicated region
    $region42: #{tpu_custom_call.1} parent=1 // pred_check
      _
    $region43: #{tpu_custom_call.1} parent=1 // pred_check_branch
      %727 = sbr.rel (0) target = $region45
    $region44: #{tpu_custom_call.1} parent=1 // pred_region
      %728 = dma.done [#allocation4], 128
    $region45: #{tpu_custom_call.1} parent=1 // pred_fallthru
      _
    %729 = vsyncpa [#allocation3], 1
    %730 = vsyncpa [#allocation4], 1

</llo_original>
